<compile_context>
chip_gen: v5e
topology: v5e:2x2
jax: 0.10.0
libtpu: 0.0.40
codegen_flags: <defaults>
</compile_context>

<pallas_src>
import jax
import jax.numpy as jnp
from jax import lax
from jax.experimental import pallas as pl
from jax.experimental.pallas import tpu as pltpu


def _round_up(x, m):
    return ((x + m - 1) // m) * m


def gather_sigmoid_kernel(ids_ref, table_ref, out_ref):
    """out[t, :] = sigmoid(table[ids[base + t], :]) for one token tile.

    ids_ref   : (n_pad,)        int32  SMEM (scalar-prefetched token ids)
    table_ref : (v_pad, o_pad)  f32    VMEM-resident fused table (E @ W + b)
    out_ref   : (tn,   o_pad)   f32    output tile (tokens on the sublane axis)
    """
    tn = out_ref.shape[0]
    v_pad = table_ref.shape[0]
    base = pl.program_id(0) * tn

    def group_body(g, carry):
        # Gather 8 rows (one f32 vreg worth of sublanes), store aligned.
        rows = []
        for u in range(8):
            tok = ids_ref[base + g * 8 + u]
            # Memory-safety clamp: OOB ids read the zero pad row ->
            # sigmoid(0) = 0.5 (PyTorch's nn.Embedding would raise instead).
            tok = jnp.clip(tok, 0, v_pad - 1)
            rows.append(table_ref[pl.ds(tok, 1), :])
        block = jnp.concatenate(rows, axis=0)                 # (8, o_pad)
        start = pl.multiple_of(g * 8, 8)
        out_ref[pl.ds(start, 8), :] = jax.nn.sigmoid(block)
        return carry

    lax.fori_loop(0, tn // 8, group_body, 0)


def build_fused_table(emb_table, dense_w, dense_b,
                      *, vmem_table_budget=8 * 1024 * 1024):
    """One-time fold of embedding + linear into a padded (v_pad, o_pad) table.

    Hoisted out of the per-call path: this V*H*O matmul + pad runs once, so
    only token ids flow per forward call.
    """
    V, H = emb_table.shape
    O = dense_w.shape[1]
    v_pad = _round_up(V, 8)
    o_lane = _round_up(O, 128)
    # Lane-dense rows when the resident table is small; otherwise keep a
    # narrow (multiple-of-8, full-dim) last axis so huge vocabs stay tiny in VMEM.
    o_pad = o_lane if v_pad * o_lane * 4 <= vmem_table_budget else _round_up(O, 8)

    f32 = jnp.float32
    fused = jnp.dot(emb_table.astype(f32), dense_w.astype(f32),
                    precision=lax.Precision.HIGHEST)
    fused = fused + dense_b.astype(f32)[None, :]               # (V, O)
    return jnp.pad(fused, ((0, v_pad - V), (0, o_pad - O)))    # (v_pad, o_pad)


def classifier_forward(token_ids, fused_table, output_dim, *, tile_n=2048):
    """token_ids (B,S) int32 -> (B,S,output_dim) f32 == sigmoid(E[x] @ W + b).

    `fused_table` is the padded (v_pad, o_pad) table from build_fused_table.
    """
    B, S = token_ids.shape
    N = B * S
    v_pad, o_pad = fused_table.shape

    # Token tile: sublane-aligned; large default keeps per-grid-step overhead
    # negligible and yields >= 2 "parallel" tiles for realistic N so both v7x
    # TensorCores get work.
    tn = min(_round_up(tile_n, 8), _round_up(N, 8))
    n_pad = _round_up(N, tn)

    ids = jnp.pad(token_ids.reshape(N).astype(jnp.int32), (0, n_pad - N))

    out = pl.pallas_call(
        gather_sigmoid_kernel,
        out_shape=jax.ShapeDtypeStruct((n_pad, o_pad), jnp.float32),
        grid_spec=pltpu.PrefetchScalarGridSpec(
            num_scalar_prefetch=1,                       # ids -> SMEM
            grid=(n_pad // tn,),
            in_specs=[
                # Fused table: same block every step -> stays resident in VMEM.
                pl.BlockSpec((v_pad, o_pad), lambda i, ids: (0, 0)),
            ],
            out_specs=pl.BlockSpec((tn, o_pad), lambda i, ids: (i, 0)),
        ),
        compiler_params=pltpu.CompilerParams(
            dimension_semantics=("parallel",)),
    )(ids, fused_table)

    probs = out[:N, :output_dim]                         # drop token / lane padding
    return probs.reshape(B, S, output_dim)


if __name__ == "__main__":
    # Small, deterministic configuration (hidden_dim matches the module default).
    vocab_size = 128
    hidden_dim = 128
    output_dim = 1
    batch, seq = 2, 8

    key = jax.random.PRNGKey(0)
    k_emb, k_w, k_b, k_ids = jax.random.split(key, 4)

    # Parameter init mirroring PyTorch defaults: N(0,1) embedding,
    # U(-1/sqrt(H), 1/sqrt(H)) for Linear weight/bias. dense_w stored as (H, O).
    emb_table = jax.random.normal(k_emb, (vocab_size, hidden_dim), jnp.float32)
    bound = 1.0 / (hidden_dim ** 0.5)
    dense_w = jax.random.uniform(k_w, (hidden_dim, output_dim), jnp.float32,
                                 minval=-bound, maxval=bound)
    dense_b = jax.random.uniform(k_b, (output_dim,), jnp.float32,
                                 minval=-bound, maxval=bound)

    token_ids = jax.random.randint(k_ids, (batch, seq), 0, vocab_size,
                                   dtype=jnp.int32)

    # One-time fusion of embedding + linear (hoisted out of the forward path).
    fused_table = jax.block_until_ready(
        build_fused_table(emb_table, dense_w, dense_b))

    out = classifier_forward(token_ids, fused_table, output_dim)
    out = jax.block_until_ready(out)

    # Pure-JAX reference of the same forward semantics.
    ref = jax.nn.sigmoid(
        jnp.dot(emb_table[token_ids], dense_w,
                precision=lax.Precision.HIGHEST) + dense_b)
    assert out.shape == (batch, seq, output_dim)
    assert jnp.allclose(out, ref, atol=1e-4), "mismatch vs reference"

    print("KERNEL_OK")
</pallas_src>

<mosaic_0001>
module attributes {stable_mosaic.version = 11 : i64} {
  func.func @gather_sigmoid_kernel(%arg0: i32, %arg1: memref<16xi32, #tpu.memory_space<smem>>, %arg2: memref<128x128xf32, #tpu.memory_space<vmem>>, %arg3: memref<16x128xf32, #tpu.memory_space<vmem>>) attributes {dimension_semantics = [#tpu.dimension_semantics<parallel>], iteration_bounds = array<i64: 1>, scalar_prefetch = 1 : i64, scratch_operands = 0 : i64, tpu.core_type = #tpu.core_type<tc>, window_params = [{pipeline_mode = #tpu.pipeline_mode<synchronous>, transform_indices = @transform_0, window_bounds = array<i64: 128, 128>}, {transform_indices = @transform_1, window_bounds = array<i64: 16, 128>}]} {
    %c16_i32 = arith.constant 16 : i32
    %0 = arith.muli %arg0, %c16_i32 : i32
    %c0_i32 = arith.constant 0 : i32
    %c2_i32 = arith.constant 2 : i32
    %1 = arith.addi %c0_i32, %c2_i32 : i32
    %c1_i32 = arith.constant 1 : i32
    scf.for %arg4 = %c0_i32 to %1 step %c1_i32  : i32 {
      %c8_i32 = arith.constant 8 : i32
      %2 = arith.muli %arg4, %c8_i32 : i32
      %3 = arith.addi %0, %2 : i32
      %c0_i32_1 = arith.constant 0 : i32
      %4 = arith.addi %3, %c0_i32_1 : i32
      %5 = arith.index_cast %4 : i32 to index
      %6 = memref.load %arg1[%5] : memref<16xi32, #tpu.memory_space<smem>>
      %c0_i32_2 = arith.constant 0 : i32
      %c127_i32 = arith.constant 127 : i32
      %7 = arith.maxsi %c0_i32_2, %6 : i32
      %8 = arith.minsi %c127_i32, %7 : i32
      %9 = arith.index_cast %8 : i32 to index
      %c0 = arith.constant 0 : index
      %10 = vector.load %arg2[%9, %c0] : memref<128x128xf32, #tpu.memory_space<vmem>>, vector<1x128xf32>
      %c8_i32_3 = arith.constant 8 : i32
      %11 = arith.muli %arg4, %c8_i32_3 : i32
      %12 = arith.addi %0, %11 : i32
      %c1_i32_4 = arith.constant 1 : i32
      %13 = arith.addi %12, %c1_i32_4 : i32
      %14 = arith.index_cast %13 : i32 to index
      %15 = memref.load %arg1[%14] : memref<16xi32, #tpu.memory_space<smem>>
      %c0_i32_5 = arith.constant 0 : i32
      %c127_i32_6 = arith.constant 127 : i32
      %16 = arith.maxsi %c0_i32_5, %15 : i32
      %17 = arith.minsi %c127_i32_6, %16 : i32
      %18 = arith.index_cast %17 : i32 to index
      %c0_7 = arith.constant 0 : index
      %19 = vector.load %arg2[%18, %c0_7] : memref<128x128xf32, #tpu.memory_space<vmem>>, vector<1x128xf32>
      %c8_i32_8 = arith.constant 8 : i32
      %20 = arith.muli %arg4, %c8_i32_8 : i32
      %21 = arith.addi %0, %20 : i32
      %c2_i32_9 = arith.constant 2 : i32
      %22 = arith.addi %21, %c2_i32_9 : i32
      %23 = arith.index_cast %22 : i32 to index
      %24 = memref.load %arg1[%23] : memref<16xi32, #tpu.memory_space<smem>>
      %c0_i32_10 = arith.constant 0 : i32
      %c127_i32_11 = arith.constant 127 : i32
      %25 = arith.maxsi %c0_i32_10, %24 : i32
      %26 = arith.minsi %c127_i32_11, %25 : i32
      %27 = arith.index_cast %26 : i32 to index
      %c0_12 = arith.constant 0 : index
      %28 = vector.load %arg2[%27, %c0_12] : memref<128x128xf32, #tpu.memory_space<vmem>>, vector<1x128xf32>
      %c8_i32_13 = arith.constant 8 : i32
      %29 = arith.muli %arg4, %c8_i32_13 : i32
      %30 = arith.addi %0, %29 : i32
      %c3_i32 = arith.constant 3 : i32
      %31 = arith.addi %30, %c3_i32 : i32
      %32 = arith.index_cast %31 : i32 to index
      %33 = memref.load %arg1[%32] : memref<16xi32, #tpu.memory_space<smem>>
      %c0_i32_14 = arith.constant 0 : i32
      %c127_i32_15 = arith.constant 127 : i32
      %34 = arith.maxsi %c0_i32_14, %33 : i32
      %35 = arith.minsi %c127_i32_15, %34 : i32
      %36 = arith.index_cast %35 : i32 to index
      %c0_16 = arith.constant 0 : index
      %37 = vector.load %arg2[%36, %c0_16] : memref<128x128xf32, #tpu.memory_space<vmem>>, vector<1x128xf32>
      %c8_i32_17 = arith.constant 8 : i32
      %38 = arith.muli %arg4, %c8_i32_17 : i32
      %39 = arith.addi %0, %38 : i32
      %c4_i32 = arith.constant 4 : i32
      %40 = arith.addi %39, %c4_i32 : i32
      %41 = arith.index_cast %40 : i32 to index
      %42 = memref.load %arg1[%41] : memref<16xi32, #tpu.memory_space<smem>>
      %c0_i32_18 = arith.constant 0 : i32
      %c127_i32_19 = arith.constant 127 : i32
      %43 = arith.maxsi %c0_i32_18, %42 : i32
      %44 = arith.minsi %c127_i32_19, %43 : i32
      %45 = arith.index_cast %44 : i32 to index
      %c0_20 = arith.constant 0 : index
      %46 = vector.load %arg2[%45, %c0_20] : memref<128x128xf32, #tpu.memory_space<vmem>>, vector<1x128xf32>
      %c8_i32_21 = arith.constant 8 : i32
      %47 = arith.muli %arg4, %c8_i32_21 : i32
      %48 = arith.addi %0, %47 : i32
      %c5_i32 = arith.constant 5 : i32
      %49 = arith.addi %48, %c5_i32 : i32
      %50 = arith.index_cast %49 : i32 to index
      %51 = memref.load %arg1[%50] : memref<16xi32, #tpu.memory_space<smem>>
      %c0_i32_22 = arith.constant 0 : i32
      %c127_i32_23 = arith.constant 127 : i32
      %52 = arith.maxsi %c0_i32_22, %51 : i32
      %53 = arith.minsi %c127_i32_23, %52 : i32
      %54 = arith.index_cast %53 : i32 to index
      %c0_24 = arith.constant 0 : index
      %55 = vector.load %arg2[%54, %c0_24] : memref<128x128xf32, #tpu.memory_space<vmem>>, vector<1x128xf32>
      %c8_i32_25 = arith.constant 8 : i32
      %56 = arith.muli %arg4, %c8_i32_25 : i32
      %57 = arith.addi %0, %56 : i32
      %c6_i32 = arith.constant 6 : i32
      %58 = arith.addi %57, %c6_i32 : i32
      %59 = arith.index_cast %58 : i32 to index
      %60 = memref.load %arg1[%59] : memref<16xi32, #tpu.memory_space<smem>>
      %c0_i32_26 = arith.constant 0 : i32
      %c127_i32_27 = arith.constant 127 : i32
      %61 = arith.maxsi %c0_i32_26, %60 : i32
      %62 = arith.minsi %c127_i32_27, %61 : i32
      %63 = arith.index_cast %62 : i32 to index
      %c0_28 = arith.constant 0 : index
      %64 = vector.load %arg2[%63, %c0_28] : memref<128x128xf32, #tpu.memory_space<vmem>>, vector<1x128xf32>
      %c8_i32_29 = arith.constant 8 : i32
      %65 = arith.muli %arg4, %c8_i32_29 : i32
      %66 = arith.addi %0, %65 : i32
      %c7_i32 = arith.constant 7 : i32
      %67 = arith.addi %66, %c7_i32 : i32
      %68 = arith.index_cast %67 : i32 to index
      %69 = memref.load %arg1[%68] : memref<16xi32, #tpu.memory_space<smem>>
      %c0_i32_30 = arith.constant 0 : i32
      %c127_i32_31 = arith.constant 127 : i32
      %70 = arith.maxsi %c0_i32_30, %69 : i32
      %71 = arith.minsi %c127_i32_31, %70 : i32
      %72 = arith.index_cast %71 : i32 to index
      %c0_32 = arith.constant 0 : index
      %73 = vector.load %arg2[%72, %c0_32] : memref<128x128xf32, #tpu.memory_space<vmem>>, vector<1x128xf32>
      %74 = tpu.concatenate %10, %19, %28, %37, %46, %55, %64, %73 in 0 : vector<1x128xf32>, vector<1x128xf32>, vector<1x128xf32>, vector<1x128xf32>, vector<1x128xf32>, vector<1x128xf32>, vector<1x128xf32>, vector<1x128xf32> -> vector<8x128xf32>
      %c8_i32_33 = arith.constant 8 : i32
      %75 = arith.muli %arg4, %c8_i32_33 : i32
      %76 = tpu.assume_multiple %75, 8 : i32
      %77 = arith.negf %74 : vector<8x128xf32>
      %78 = math.exp %77 : vector<8x128xf32>
      %cst = arith.constant 1.000000e+00 : f32
      %79 = vector.broadcast %cst : f32 to vector<8x128xf32>
      %80 = arith.addf %79, %78 : vector<8x128xf32>
      %81 = arith.divf %79, %80 : vector<8x128xf32>
      %82 = arith.index_cast %76 : i32 to index
      %c0_34 = arith.constant 0 : index
      %83 = vector.load %arg3[%82, %c0_34] : memref<16x128xf32, #tpu.memory_space<vmem>>, vector<8x128xf32>
      tpu.vector_store %arg3[%82, %c0_34], %81 {strides = array<i32>} : memref<16x128xf32, #tpu.memory_space<vmem>>, vector<8x128xf32>,
    }
    %c2_i32_0 = arith.constant 2 : i32
    return
  }
  func.func @transform_0(%arg0: i32, %arg1: memref<16xi32, #tpu.memory_space<smem>>) -> (i32, i32) {
    %c0_i32 = arith.constant 0 : i32
    %c0_i32_0 = arith.constant 0 : i32
    %c0_i32_1 = arith.constant 0 : i32
    return %c0_i32, %c0_i32_0 : i32, i32
  }
  func.func @transform_1(%arg0: i32, %arg1: memref<16xi32, #tpu.memory_space<smem>>) -> (i32, i32) {
    %c0_i32 = arith.constant 0 : i32
    %c0_i32_0 = arith.constant 0 : i32
    return %arg0, %c0_i32 : i32, i32
  }
}

</mosaic_0001>

<llo_original>
// kernel: tpu_custom_call.1
$region0: #{tpu_custom_call.1}
  #allocation0 [shape = 'u32[]', space=smem, size = 0x4, offset = 0x4, fixed_abs, tag = 'smem constant byte address 0x4 - core index']
  #allocation1 [shape = 'u32[72,128]{1,0:T(1,128)}', space=vmem, size = 0x9000, scoped, tag = 'internal scratch']
  #allocation2 [shape = 's32[1]{0}', space=sflag, size = 0x4, scoped, tag = 'scoped memory for tpu_custom_call.1']
  #allocation3 [shape = 'u8[512]{0}', space=smem, size = 0x200, scoped, tag = 'prefetched SMEM operand 0']
  %s0 = inlined_call_operand.hbm [shape: s32[16], index: 0, kind: input, shape index: {}]
  %s1 = inlined_call_operand.hbm [shape: f32[128,128], index: 1, kind: input, shape index: {}]
  %s2 = inlined_call_operand.hbm [shape: f32[16,128], index: 2, kind: output, shape index: {}]
  %s3 = sld [smem:[#allocation0]]
  $region25: #{tpu_custom_call.1} parent=0
    _
  %s5 = ssub.s32 1, %s3
  %s6 = scalar_select 0, %s5, %s3
  %s8 = sshll.u32 %s0, 4
  %s9 = int_to_ptr.hbm [resolvable:$true] %s8
  %11 = dma.hbm_to_smem %s9, 16, [#allocation3], [#allocation2]
  %13 = dma.done [#allocation2], 16
  %14 = sfence
  $region1: #{tpu_custom_call.1} parent=0
    #allocation4 [shape = 'u8[65536]{0}', space=vmem, size = 0x10000, scoped, tag = 'input window, operand 1, single buffered']
    #allocation5 [shape = 's32[1]{0}', space=sflag, size = 0x4, scoped, tag = 'scoped memory for tpu_custom_call.1']
    #allocation6 [shape = 's32[1]{0}', space=sflag, size = 0x4, scoped, tag = 'scoped memory for tpu_custom_call.1']
    #allocation7 [shape = 'u8[8192]{0}', space=vmem, size = 0x2000, scoped, tag = 'output window, operand 0, single buffered']
    %15 = vsyncpa [#allocation5], 0
    %16 = vsyncpa [#allocation6], 0
    // Predicated region
    $region2: #{tpu_custom_call.1} parent=1 // pred_check
      _
    $region3: #{tpu_custom_call.1} parent=1 // pred_check_branch
      %18 = sbr.rel (0) target = $region5
    $region4: #{tpu_custom_call.1} parent=1 // pred_region
      %20 = vsyncadd [#allocation5], 0
      %s21 = sshll.u32 %s1, 4
      %s22 = int_to_ptr.hbm [resolvable:$true] %s21
      %s23 = sshll.u32 [#allocation4], 4
      %s24 = int_to_ptr.vmem [resolvable:$true] %s23
      %29 = dma.hbm_to_vmem [thread:$0]  %s22, 2048, %s24, [#allocation5], 128, 128, 8
    $region5: #{tpu_custom_call.1} parent=1 // pred_fallthru
      _
    // Predicated region
    $region6: #{tpu_custom_call.1} parent=1 // pred_check
      _
    $region7: #{tpu_custom_call.1} parent=1 // pred_check_branch
      %31 = sbr.rel (0) target = $region9
    $region8: #{tpu_custom_call.1} parent=1 // pred_region
      %33 = dma.done [#allocation5], 2048
    $region9: #{tpu_custom_call.1} parent=1 // pred_fallthru
      _
    %s34 = smul.u32 0, 16
    loop: start=0, step=1, limit=2
    $region10: #{tpu_custom_call.1} parent=1 // loop_pre_header
      _
    $region11: #{tpu_custom_call.1} parent=1 // loop_header
      %s36 = sphi 0, %s40
      %p37 = scmp.ge.s32.totalorder %s36, 2
    $region12: #{tpu_custom_call.1} parent=1 // loop_header_branch
      %39 = sbr.rel (%p37) target = $region16
    $region13: #{tpu_custom_call.1} parent=1 // loop_body
      %s41 = smul.u32 %s36, 8
      %s42 = sadd.s32 %s34, %s41
      %s43 = sld [smem:[#allocation3 + %s42]]
      %p44 = scmp.gt.s32.totalorder %s43, 0
      %s45 = scalar_select %p44, %s43, 0
      %p46 = scmp.lt.s32.totalorder %s45, 127
      %s47 = scalar_select %p46, %s45, 127
      %s48 = scalar_lea.vmem [#allocation4], %s47
      %v49 = vld [vmem:[%s48] sm:$0x1]
      %s50 = sadd.s32 %s42, 1
      %s51 = sld [smem:[#allocation3 + %s50]]
      %p52 = scmp.gt.s32.totalorder %s51, 0
      %s53 = scalar_select %p52, %s51, 0
      %p54 = scmp.lt.s32.totalorder %s53, 127
      %s55 = scalar_select %p54, %s53, 127
      %s56 = scalar_lea.vmem [#allocation4], %s55
      %v57 = vld [vmem:[%s56] sm:$0x1]
      %s58 = sadd.s32 %s42, 2
      %s59 = sld [smem:[#allocation3 + %s58]]
      %p60 = scmp.gt.s32.totalorder %s59, 0
      %s61 = scalar_select %p60, %s59, 0
      %p62 = scmp.lt.s32.totalorder %s61, 127
      %s63 = scalar_select %p62, %s61, 127
      %s64 = scalar_lea.vmem [#allocation4], %s63
      %v65 = vld [vmem:[%s64] sm:$0x1]
      %s66 = sadd.s32 %s42, 3
      %s67 = sld [smem:[#allocation3 + %s66]]
      %p68 = scmp.gt.s32.totalorder %s67, 0
      %s69 = scalar_select %p68, %s67, 0
      %p70 = scmp.lt.s32.totalorder %s69, 127
      %s71 = scalar_select %p70, %s69, 127
      %s72 = scalar_lea.vmem [#allocation4], %s71
      %v73 = vld [vmem:[%s72] sm:$0x1]
      %s74 = sadd.s32 %s42, 4
      %s75 = sld [smem:[#allocation3 + %s74]]
      %p76 = scmp.gt.s32.totalorder %s75, 0
      %s77 = scalar_select %p76, %s75, 0
      %p78 = scmp.lt.s32.totalorder %s77, 127
      %s79 = scalar_select %p78, %s77, 127
      %s80 = scalar_lea.vmem [#allocation4], %s79
      %v81 = vld [vmem:[%s80] sm:$0x1]
      %s82 = sadd.s32 %s42, 5
      %s83 = sld [smem:[#allocation3 + %s82]]
      %p84 = scmp.gt.s32.totalorder %s83, 0
      %s85 = scalar_select %p84, %s83, 0
      %p86 = scmp.lt.s32.totalorder %s85, 127
      %s87 = scalar_select %p86, %s85, 127
      %s88 = scalar_lea.vmem [#allocation4], %s87
      %v89 = vld [vmem:[%s88] sm:$0x1]
      %s90 = sadd.s32 %s42, 6
      %s91 = sld [smem:[#allocation3 + %s90]]
      %p92 = scmp.gt.s32.totalorder %s91, 0
      %s93 = scalar_select %p92, %s91, 0
      %p94 = scmp.lt.s32.totalorder %s93, 127
      %s95 = scalar_select %p94, %s93, 127
      %s96 = scalar_lea.vmem [#allocation4], %s95
      %v97 = vld [vmem:[%s96] sm:$0x1]
      %s98 = sadd.s32 %s42, 7
      %s99 = sld [smem:[#allocation3 + %s98]]
      %p100 = scmp.gt.s32.totalorder %s99, 0
      %s101 = scalar_select %p100, %s99, 0
      %p102 = scmp.lt.s32.totalorder %s101, 127
      %s103 = scalar_select %p102, %s101, 127
      %s104 = scalar_lea.vmem [#allocation4], %s103
      %v105 = vld [vmem:[%s104] sm:$0x1]
      %v107 = vrot.slane %v57, 7
      %v110 = vrot.slane %v65, 6
      %v113 = vrot.slane %v73, 5
      %v116 = vrot.slane %v81, 4
      %v119 = vrot.slane %v89, 3
      %v122 = vrot.slane %v97, 2
      %v125 = vrot.slane %v105, 1
      %vm127 = vcmask 1040384
      %v128 = vsel %vm127, %v49, %v107
      %vm129 = vcmask 1041408
      %v130 = vsel %vm129, %v128, %v110
      %vm131 = vcmask 1042432
      %v132 = vsel %vm131, %v130, %v113
      %vm133 = vcmask 1043456
      %v134 = vsel %vm133, %v132, %v116
      %vm135 = vcmask 1044480
      %v136 = vsel %vm135, %v134, %v119
      %vm137 = vcmask 1045504
      %v138 = vsel %vm137, %v136, %v122
      %vm139 = vcmask 1046528
      %v140 = vsel %vm139, %v138, %v125
      %v141 = vxor.u32 %v140, 2147483648
      %v142 = vmul.f32 %v141, 1.442695
      %v143 = vpow.pop %v142
      %v144 = vadd.f32 %v143, 1.0
      %v145 = vrcp.pop %v144
      %v146 = vmul.f32 %v144, %v145
      %v147 = vsub.f32 1.0, %v146
      %v148 = vmul.f32 %v145, %v147
      %v149 = vadd.f32 %v145, %v148
      %vm150 = vweird.f32 %v144
      %vm151 = vweird.f32 %v145
      %vm152 = vmor %vm150, %vm151
      %v153 = vsel %vm152, %v145, %v149
      %v154 = vand.u32 2147483647, %v144
      %vm155 = vcmp.eq.f32.partialorder %v154, 8.507059e+37
      %v156 = vand.u32 %v144, 2147483648
      %v157 = vor.u32 1.1754944e-38, %v156
      %v158 = vsel %vm155, %v157, %v153
      %v159 = vmul.f32 1.0, %v158
      %s160 = scalar_lea.vmem [#allocation7], %s41
      %161 = vst [vmem:[%s160] sm:$0xff] %v159
    $region14: #{tpu_custom_call.1} parent=1 // loop_footer
      %s40 = sadd.s32 1, %s36
    $region15: #{tpu_custom_call.1} parent=1 // loop_footer_branch
      %35 = sbr.rel target = $region11
    $region16: #{tpu_custom_call.1} parent=1 // loop_exit
      _
    // Predicated region
    $region17: #{tpu_custom_call.1} parent=1 // pred_check
      _
    $region18: #{tpu_custom_call.1} parent=1 // pred_check_branch
      %163 = sbr.rel (0) target = $region20
    $region19: #{tpu_custom_call.1} parent=1 // pred_region
      %165 = vsyncadd [#allocation6], 0
      %s166 = sshll.u32 [#allocation7], 4
      %s167 = int_to_ptr.vmem [resolvable:$true] %s166
      %s168 = sshll.u32 %s2, 4
      %s169 = int_to_ptr.hbm [resolvable:$true] %s168
      %174 = dma.vmem_to_hbm [thread:$0]  %s167, 256, %s169, [#allocation6], 128, 128, 8
    $region20: #{tpu_custom_call.1} parent=1 // pred_fallthru
      _
    // Predicated region
    $region21: #{tpu_custom_call.1} parent=1 // pred_check
      _
    $region22: #{tpu_custom_call.1} parent=1 // pred_check_branch
      %176 = sbr.rel (0) target = $region24
    $region23: #{tpu_custom_call.1} parent=1 // pred_region
      %178 = dma.done [#allocation6], 256
    $region24: #{tpu_custom_call.1} parent=1 // pred_fallthru
      _
    %179 = vsyncpa [#allocation5], 1
    %180 = vsyncpa [#allocation6], 1

</llo_original>
